<compile_context>
chip_gen: v6e
topology: v6e:2x2x1
jax: 0.10.0
libtpu: 0.0.40
codegen_flags: <defaults>
</compile_context>

<pallas_src>
import functools

import jax
import jax.numpy as jnp
from jax.experimental import pallas as pl
from jax.experimental.pallas import tpu as pltpu


_LANE = 128
_SUBLANE = 8
_MAX_CHUNK_TS = 16384      # cap on spatial tile when chunking (keeps unroll small)
_MIN_CHUNK_TS = 2048       # >= 8 KiB per-row DMA run for f32
_MAX_ROW_TILE = 8192
_MAX_LANE_CHUNKS = 256     # use lane-wide accumulator only for modest unroll


def _round_up(v, m):
    return ((v + m - 1) // m) * m


def _vmem_budget():
    """(per-block byte budget, vmem_limit_bytes) derived from the chip's VMEM."""
    try:
        vmem = int(pltpu.get_tpu_info().vmem_capacity_bytes)
    except Exception:
        vmem = 64 * 1024 * 1024  # conservative (v7x-sized) fallback
    block = max(2 * 1024 * 1024, min(16 * 1024 * 1024, vmem // 8))
    limit = max(32 * 1024 * 1024, min(vmem // 2, 96 * 1024 * 1024))
    return block, limit


def _choose_tiles(rows, spatial, itemsize, block_bytes):
    """Pick (tm, ts, rows_padded, spatial_padded) that are layout-legal, fit the
    per-block budget, and keep DMA runs long."""
    # ---- spatial tile ----
    if spatial * _SUBLANE * itemsize <= block_bytes:
        # Whole rows per block: one fully contiguous HBM read, single reduce.
        ts, spatial_p = spatial, spatial
    else:
        cap = min(_MAX_CHUNK_TS, block_bytes // (_SUBLANE * itemsize))
        ts = _LANE
        while ts * 2 <= cap:
            ts *= 2
        # Prefer a divisor of `spatial` (no padding), but never below the
        # minimum contiguous-run floor.
        spatial_p = None
        t = ts
        while t >= _MIN_CHUNK_TS:
            if spatial % t == 0:
                ts, spatial_p = t, spatial
                break
            t //= 2
        if spatial_p is None:
            spatial_p = _round_up(spatial, ts)   # zero-pad (exact for sums)

    # ---- row tile ----
    max_tm = (block_bytes // (ts * itemsize)) // _SUBLANE * _SUBLANE
    max_tm = max(_SUBLANE, min(max_tm, _MAX_ROW_TILE))
    if rows <= max_tm:
        return rows, ts, rows, spatial_p          # full extent: always legal
    t = max_tm
    while t >= _SUBLANE:
        if rows % t == 0:
            return t, ts, rows, spatial_p
        t -= _SUBLANE
    # No clean divisor (e.g. prime row count): pad rows, slice output later.
    tm = max_tm
    return tm, ts, _round_up(rows, tm), spatial_p


def _gap_kernel(x_ref, o_ref, acc_ref, *, inv_hw, lane_chunks):
    # x_ref: (TM, TS); o_ref: (TM, 1); acc_ref: (TM, 128) or (TM, 1) f32.
    k = pl.program_id(1)

    @pl.when(k == 0)
    def _init():
        acc_ref[...] = jnp.zeros_like(acc_ref)

    x = x_ref[...]
    if lane_chunks is None:
        # Spatial tile not 128-aligned (tiny / odd spatial, single k step):
        # direct f32 row-sum.
        acc_ref[...] += jnp.sum(x, axis=1, keepdims=True, dtype=jnp.float32)
    else:
        # Lane-wide accumulator: fold 128-wide lane tiles with pure VPU adds.
        # Static, 128-aligned lane slices are zero-cost vreg selections.
        part = x[:, 0:_LANE].astype(jnp.float32)
        for b in range(1, lane_chunks):
            part = part + x[:, b * _LANE:(b + 1) * _LANE].astype(jnp.float32)
        acc_ref[...] += part

    @pl.when(k == pl.num_programs(1) - 1)
    def _finalize():
        acc = acc_ref[...]
        if lane_chunks is not None:
            # Single cross-lane (XLU) reduce per row tile for the whole grid.
            acc = jnp.sum(acc, axis=1, keepdims=True)
        o_ref[...] = (acc * inv_hw).astype(o_ref.dtype)


def global_avg_pool2d(x, *, block_bytes=None, vmem_limit=None,
                      min_kernel_bytes=1 << 20):
    """x: (N, C, H, W) -> (N, C, 1, 1), mean over H and W
    (== F.avg_pool2d(x, kernel_size=x.size()[2:]))."""
    N, C, H, W = x.shape
    rows, spatial = N * C, H * W
    itemsize = jnp.dtype(x.dtype).itemsize

    # Tiny-input fast path: kernel launch overhead dominates below ~1 MiB.
    if rows * spatial * itemsize < min_kernel_bytes:
        return jnp.mean(x, axis=(2, 3), keepdims=True)

    default_block, default_limit = _vmem_budget()
    block_bytes = default_block if block_bytes is None else block_bytes
    vmem_limit = default_limit if vmem_limit is None else vmem_limit

    x2 = x.reshape(rows, spatial)
    tm, ts, rows_p, spatial_p = _choose_tiles(rows, spatial, itemsize, block_bytes)
    if rows_p != rows or spatial_p != spatial:
        # Zero padding is exact: zeros add nothing to the sum and we scale by
        # the true 1/(H*W); padded output rows are sliced off below.
        x2 = jnp.pad(x2, ((0, rows_p - rows), (0, spatial_p - spatial)))

    lane_chunks = (ts // _LANE
                   if (ts % _LANE == 0 and ts // _LANE <= _MAX_LANE_CHUNKS)
                   else None)
    acc_cols = _LANE if lane_chunks is not None else 1

    grid = (rows_p // tm, spatial_p // ts)
    inv_hw = 1.0 / float(spatial)

    out = pl.pallas_call(
        functools.partial(_gap_kernel, inv_hw=inv_hw, lane_chunks=lane_chunks),
        out_shape=jax.ShapeDtypeStruct((rows_p, 1), x.dtype),
        grid_spec=pltpu.PrefetchScalarGridSpec(
            num_scalar_prefetch=0,
            grid=grid,
            in_specs=[pl.BlockSpec((tm, ts), lambda i, k: (i, k))],
            out_specs=pl.BlockSpec((tm, 1), lambda i, k: (i, 0)),
            scratch_shapes=[pltpu.VMEM((tm, acc_cols), jnp.float32)],
        ),
        compiler_params=pltpu.CompilerParams(
            dimension_semantics=("parallel", "arbitrary"),
            vmem_limit_bytes=vmem_limit,
        ),
        cost_estimate=pl.CostEstimate(
            flops=rows * spatial,
            transcendentals=0,
            bytes_accessed=rows * spatial * itemsize + rows * itemsize,
        ),
    )(x2)

    return out[:rows].reshape(N, C, 1, 1)


def _ref_pool(x):
    return jnp.mean(x.astype(jnp.float32), axis=(2, 3), keepdims=True)


if __name__ == "__main__":
    key = jax.random.PRNGKey(0)
    k0, k1, k2, k3 = jax.random.split(key, 4)

    # 1) Primary small shape (2, 4, 16, 16), forced through the Pallas kernel.
    x = jax.random.normal(k0, (2, 4, 16, 16), dtype=jnp.float32)
    out = jax.block_until_ready(global_avg_pool2d(x, min_kernel_bytes=0))
    assert out.shape == (2, 4, 1, 1), out.shape
    assert jnp.allclose(out, _ref_pool(x), atol=1e-5, rtol=1e-5)

    # 1b) Default path (tiny input -> jnp.mean fast path).
    out_fast = jax.block_until_ready(global_avg_pool2d(x))
    assert jnp.allclose(out_fast, _ref_pool(x), atol=1e-5, rtol=1e-5)

    # 2) Multi-step reduction path (spatial chunked across the grid's k axis)
    #    via a small explicit block budget.
    x2 = jax.random.normal(k1, (16, 8, 32, 64), dtype=jnp.float32)
    out2 = jax.block_until_ready(
        global_avg_pool2d(x2, block_bytes=32 * 1024, min_kernel_bytes=0))
    assert jnp.allclose(out2, _ref_pool(x2), atol=1e-5, rtol=1e-5)

    # 3) Row-padding fallback (row count with no tile divisor).
    x3 = jax.random.normal(k2, (3, 5, 16, 16), dtype=jnp.float32)
    out3 = jax.block_until_ready(
        global_avg_pool2d(x3, block_bytes=8 * 1024, min_kernel_bytes=0))
    assert out3.shape == (3, 5, 1, 1)
    assert jnp.allclose(out3, _ref_pool(x3), atol=1e-5, rtol=1e-5)

    # 4) Non-128-aligned spatial extent (simple accumulator path).
    x4 = jax.random.normal(k3, (2, 3, 7, 7), dtype=jnp.float32)
    out4 = jax.block_until_ready(global_avg_pool2d(x4, min_kernel_bytes=0))
    assert jnp.allclose(out4, _ref_pool(x4), atol=1e-5, rtol=1e-5)

    # 5) bf16 input through the kernel (f32 accumulation, bf16 output).
    xb = jax.random.normal(k0, (2, 4, 16, 16), dtype=jnp.bfloat16)
    outb = jax.block_until_ready(global_avg_pool2d(xb, min_kernel_bytes=0))
    assert jnp.allclose(outb.astype(jnp.float32), _ref_pool(xb),
                        atol=2e-2, rtol=2e-2)

    print("KERNEL_OK")
</pallas_src>

<mosaic_0001>
module attributes {stable_mosaic.version = 11 : i64} {
  func.func @_gap_kernel(%arg0: i32, %arg1: i32, %arg2: memref<8x256xf32, #tpu.memory_space<vmem>>, %arg3: memref<8x1xf32, #tpu.memory_space<vmem>>, %arg4: memref<8x128xf32, #tpu.memory_space<vmem>>) attributes {dimension_semantics = [#tpu.dimension_semantics<parallel>, #tpu.dimension_semantics<arbitrary>], iteration_bounds = array<i64: 1, 1>, scalar_prefetch = 0 : i64, scratch_operands = 1 : i64, tpu.core_type = #tpu.core_type<tc>, window_params = [{transform_indices = @transform_0, window_bounds = array<i64: 8, 256>}, {transform_indices = @transform_1, window_bounds = array<i64: 8, 1>}]} {
    %c0_i32 = arith.constant 0 : i32
    %0 = arith.cmpi eq, %arg1, %c0_i32 : i32
    %1 = arith.extui %0 : i1 to i32
    %c0_i32_0 = arith.constant 0 : i32
    %2 = arith.cmpi ne, %1, %c0_i32_0 : i32
    scf.if %2 {
      %cst = arith.constant 0.000000e+00 : f32
      %13 = vector.broadcast %cst : f32 to vector<8x128xf32>
      %c0_8 = arith.constant 0 : index
      %c0_9 = arith.constant 0 : index
      %14 = vector.load %arg4[%c0_8, %c0_9] : memref<8x128xf32, #tpu.memory_space<vmem>>, vector<8x128xf32>
      tpu.vector_store %arg4[%c0_8, %c0_9], %13 {strides = array<i32>} : memref<8x128xf32, #tpu.memory_space<vmem>>, vector<8x128xf32>,
    } else {
    }
    %c0 = arith.constant 0 : index
    %c0_1 = arith.constant 0 : index
    %3 = vector.load %arg2[%c0, %c0_1] : memref<8x256xf32, #tpu.memory_space<vmem>>, vector<8x256xf32>
    %4 = vector.extract_strided_slice %3 {offsets = [0, 0], sizes = [8, 128], strides = [1, 1]} : vector<8x256xf32> to vector<8x128xf32>
    %5 = vector.extract_strided_slice %3 {offsets = [0, 128], sizes = [8, 128], strides = [1, 1]} : vector<8x256xf32> to vector<8x128xf32>
    %6 = arith.addf %4, %5 : vector<8x128xf32>
    %c0_2 = arith.constant 0 : index
    %c0_3 = arith.constant 0 : index
    %7 = vector.load %arg4[%c0_2, %c0_3] : memref<8x128xf32, #tpu.memory_space<vmem>>, vector<8x128xf32>
    %8 = arith.addf %7, %6 : vector<8x128xf32>
    %c0_4 = arith.constant 0 : index
    %c0_5 = arith.constant 0 : index
    %9 = vector.load %arg4[%c0_4, %c0_5] : memref<8x128xf32, #tpu.memory_space<vmem>>, vector<8x128xf32>
    tpu.vector_store %arg4[%c0_4, %c0_5], %8 {strides = array<i32>} : memref<8x128xf32, #tpu.memory_space<vmem>>, vector<8x128xf32>,
    %c0_i32_6 = arith.constant 0 : i32
    %10 = arith.cmpi eq, %arg1, %c0_i32_6 : i32
    %11 = arith.extui %10 : i1 to i32
    %c0_i32_7 = arith.constant 0 : i32
    %12 = arith.cmpi ne, %11, %c0_i32_7 : i32
    scf.if %12 {
      %c0_8 = arith.constant 0 : index
      %c0_9 = arith.constant 0 : index
      %13 = vector.load %arg4[%c0_8, %c0_9] : memref<8x128xf32, #tpu.memory_space<vmem>>, vector<8x128xf32>
      %cst = arith.constant dense<0.000000e+00> : vector<8xf32>
      %14 = vector.multi_reduction <add>, %13, %cst [1] : vector<8x128xf32> to vector<8xf32>
      %15 = vector.shape_cast %14 : vector<8xf32> to vector<8x1xf32>
      %cst_10 = arith.constant 3.906250e-03 : f32
      %16 = vector.broadcast %cst_10 : f32 to vector<8x1xf32>
      %17 = arith.mulf %15, %16 : vector<8x1xf32>
      %c0_11 = arith.constant 0 : index
      %c0_12 = arith.constant 0 : index
      %18 = vector.load %arg3[%c0_11, %c0_12] : memref<8x1xf32, #tpu.memory_space<vmem>>, vector<8x1xf32>
      tpu.vector_store %arg3[%c0_11, %c0_12], %17 {strides = array<i32>} : memref<8x1xf32, #tpu.memory_space<vmem>>, vector<8x1xf32>,
    } else {
    }
    return
  }
  func.func @transform_0(%arg0: i32, %arg1: i32) -> (i32, i32) {
    %c0_i32 = arith.constant 0 : i32
    return %arg0, %arg1 : i32, i32
  }
  func.func @transform_1(%arg0: i32, %arg1: i32) -> (i32, i32) {
    %c0_i32 = arith.constant 0 : i32
    %c0_i32_0 = arith.constant 0 : i32
    return %arg0, %c0_i32 : i32, i32
  }
}

</mosaic_0001>

<llo_original>
// kernel: tpu_custom_call.1
$region0: #{tpu_custom_call.1}
  #allocation0 [shape = 'u32[]', space=smem, size = 0x4, offset = 0x4, fixed_abs, tag = 'smem constant byte address 0x4 - core index']
  #allocation1 [shape = 'u32[144,128]{1,0:T(1,128)}', space=vmem, size = 0x12000, scoped, tag = 'internal scratch']
  #allocation2 [shape = 'f32[8,128]{1,0:T(8,128)}', space=vmem, size = 0x1000, scoped, tag = 'scratch operand']
  %s0 = inlined_call_operand.hbm [shape: f32[8,256], index: 0, kind: input, shape index: {}]
  %s1 = inlined_call_operand.vmem [shape: f32[8,1], index: 1, kind: output, shape index: {}]
  %s2 = sld [smem:[#allocation0]]
  $region26: #{tpu_custom_call.1} parent=0
    _
  %s4 = ssub.s32 1, %s2
  %s5 = scalar_select 0, %s4, %s2
  $region1: #{tpu_custom_call.1} parent=0
    #allocation3 [shape = 'u8[8192]{0}', space=vmem, size = 0x2000, scoped, tag = 'input window, operand 0, single buffered']
    #allocation4 [shape = 's32[1]{0}', space=sflag, size = 0x4, scoped, tag = 'scoped memory for tpu_custom_call.1']
    %6 = vsyncpa [#allocation4], 0
    // Predicated region
    $region2: #{tpu_custom_call.1} parent=1 // pred_check
      _
    $region3: #{tpu_custom_call.1} parent=1 // pred_check_branch
      %8 = sbr.rel (0) target = $region5
    $region4: #{tpu_custom_call.1} parent=1 // pred_region
      %s10 = ssub.s32 256, 256
      %11 = vsyncadd [#allocation4], %s10
      %s13 = sshll.u32 [#allocation3], 4
      %s14 = int_to_ptr.vmem [resolvable:$true] %s13
      %16 = dma.hbm_to_vmem [thread:$0]  %s0, 256, %s14, [#allocation4]
    $region5: #{tpu_custom_call.1} parent=1 // pred_fallthru
      _
    // Predicated region
    $region6: #{tpu_custom_call.1} parent=1 // pred_check
      _
    $region7: #{tpu_custom_call.1} parent=1 // pred_check_branch
      %18 = sbr.rel (0) target = $region9
    $region8: #{tpu_custom_call.1} parent=1 // pred_region
      %19 = dma.done [#allocation4], 256
    $region9: #{tpu_custom_call.1} parent=1 // pred_fallthru
      _
    %p20 = scmp.eq.s32.totalorder 0, 0
    // Predicated region
    $region10: #{tpu_custom_call.1} parent=1 // pred_check
      %p21 = pneg %p20
    $region11: #{tpu_custom_call.1} parent=1 // pred_check_branch
      %23 = sbr.rel (%p21) target = $region13
    $region12: #{tpu_custom_call.1} parent=1 // pred_region
      %24 = vst [vmem:[#allocation2] sm:$0xff] 0.0
    $region13: #{tpu_custom_call.1} parent=1 // pred_fallthru
      _
    %v25 = vld [vmem:[#allocation3] sm:$0xff]
    %v26 = vld [vmem:[#allocation3 + $0x8] sm:$0xff]
    %v27 = vadd.f32 %v25, %v26
    %v28 = vld [vmem:[#allocation2] sm:$0xff]
    %v29 = vadd.f32 %v28, %v27
    %30 = vst [vmem:[#allocation2] sm:$0xff] %v29
    // Predicated region
    $region14: #{tpu_custom_call.1} parent=1 // pred_check
      %p31 = pneg %p20
    $region15: #{tpu_custom_call.1} parent=1 // pred_check_branch
      %33 = sbr.rel (%p31) target = $region17
    $region16: #{tpu_custom_call.1} parent=1 // pred_region
      %v34 = vld [vmem:[#allocation2] sm:$0xff]
      %35 = vadd.xlane.f32.xlu0 %v34
      %v36 = vpop.xlane.xlu0 %35
      %v37 = vmul.f32 %v36, 0.00390625
      %vm38 = vcmask 7168
      %39 = vst.msk [vmem:[%s1] sm:$0xff] %vm38, %v37
    $region17: #{tpu_custom_call.1} parent=1 // pred_fallthru
      _
    // Predicated region
    $region18: #{tpu_custom_call.1} parent=1 // pred_check
      _
    $region19: #{tpu_custom_call.1} parent=1 // pred_check_branch
      %41 = sbr.rel (0) target = $region21
    $region20: #{tpu_custom_call.1} parent=1 // pred_region
      _
    $region21: #{tpu_custom_call.1} parent=1 // pred_fallthru
      _
    // Predicated region
    $region22: #{tpu_custom_call.1} parent=1 // pred_check
      _
    $region23: #{tpu_custom_call.1} parent=1 // pred_check_branch
      %43 = sbr.rel (0) target = $region25
    $region24: #{tpu_custom_call.1} parent=1 // pred_region
      _
    $region25: #{tpu_custom_call.1} parent=1 // pred_fallthru
      _
    %44 = vsyncpa [#allocation4], 1

</llo_original>
